<compile_context>
chip_gen: v5e
topology: v5e:2x2
jax: 0.10.0
libtpu: 0.0.40
codegen_flags: <defaults>
</compile_context>

<pallas_src>
import functools

import jax
import jax.numpy as jnp
from jax.experimental import pallas as pl
from jax.experimental.pallas import tpu as pltpu

EFFNETB1_EMB_DIM = 1280
MLP_HIDDEN = 128
OUT_CHANNELS = 1
BN_EPS = 1e-5
OUT_PAD = 128          # lane-dense logits slab; column 0 holds the logit


def effnet_kernel(img_ref, ws_ref, bs_ref, w1_ref, b1_ref, w2t_ref, b2_ref,
                  out_ref, *, C, HW):
    """Fused backbone stand-in + classifier head for one batch tile.

    img_ref : (TB, C*HW) bf16   lane-dense image tile (pipelined over batch)
    ws_ref  : (C, E)      f32   stem projection, GAP 1/(H*W) scale pre-folded
    bs_ref  : (1, E)      f32
    w1_ref  : (E, H)      bf16  Linear(E->H) with eval-BatchNorm folded in
    b1_ref  : (1, H)      f32
    w2t_ref : (1, H)      f32   Linear(H->1) weight (transposed row)
    b2_ref  : (1,)        f32   SMEM scalar
    out_ref : (TB, OUT_PAD) f32 lane-dense logits slab
    """
    # ---- backbone stand-in: global average pool + linear stem projection ----
    # TODO(synk): the geffnet tf_efficientnet_b1_ns conv backbone is not
    # re-implemented; it is approximated by GAP + a linear projection to 1280.
    # Streaming per-channel f32 reduction; no full-tile f32 upcast temporary.
    cols = []
    for c in range(C):
        chan = img_ref[:, pl.ds(c * HW, HW)]                       # (TB, HW) bf16
        cols.append(jnp.sum(chan, axis=-1, keepdims=True, dtype=jnp.float32))
    pooled = jnp.concatenate(cols, axis=-1)                        # (TB, C) f32; 1/HW folded in ws

    emb = jnp.dot(pooled, ws_ref[...],
                  preferred_element_type=jnp.float32) + bs_ref[...]       # (TB, E)

    # ---- classifier: Dropout(id) -> Linear(+BN folded) -> Swish -> Dropout(id) -> Linear
    h = jnp.dot(emb.astype(jnp.bfloat16), w1_ref[...],
                preferred_element_type=jnp.float32) + b1_ref[...]         # (TB, H)
    h = h * jax.nn.sigmoid(h)                                             # Swish
    logits = jnp.sum(h * w2t_ref[...], axis=-1, keepdims=True) + b2_ref[0]  # (TB, 1)
    out_ref[...] = jnp.broadcast_to(logits, out_ref.shape).astype(out_ref.dtype)


def init_params(key, in_ch):
    ks = jax.random.split(key, 4)
    emb = EFFNETB1_EMB_DIM
    return {
        # backbone stand-in (stem projection)
        "w_stem": jax.random.normal(ks[0], (in_ch, emb), jnp.float32) * 0.05,
        "b_stem": jnp.zeros((1, emb), jnp.float32),
        # classifier Linear(1280 -> 128)
        "w1": jax.random.normal(ks[1], (emb, MLP_HIDDEN), jnp.float32) * (emb ** -0.5),
        "b1": jax.random.normal(ks[2], (1, MLP_HIDDEN), jnp.float32) * 0.01,
        # BatchNorm1d(128) — eval-mode running stats
        "gamma": jnp.ones((1, MLP_HIDDEN), jnp.float32),
        "beta": jnp.zeros((1, MLP_HIDDEN), jnp.float32),
        "running_mean": jnp.zeros((1, MLP_HIDDEN), jnp.float32),
        "running_var": jnp.ones((1, MLP_HIDDEN), jnp.float32),
        # classifier Linear(128 -> 1)
        "w2": jax.random.normal(ks[3], (MLP_HIDDEN, OUT_CHANNELS), jnp.float32) * (MLP_HIDDEN ** -0.5),
        "b2": jnp.zeros((1, OUT_CHANNELS), jnp.float32),
    }


def effnet_forward(image, params, *, tb=None):
    B, C, H, W = image.shape
    HW = H * W
    emb_dim = params["w_stem"].shape[1]
    hidden = params["w1"].shape[1]

    # ---- wrapper-side constant folding (inference) ----
    # GAP scale folded into the stem weight; BatchNorm1d(eval) folded into w1/b1.
    w_stem = (params["w_stem"] / float(HW)).astype(jnp.float32)            # (C, E)
    b_stem = params["b_stem"].astype(jnp.float32)                          # (1, E)
    bn_scale = params["gamma"] * jax.lax.rsqrt(params["running_var"] + BN_EPS)
    w1f = (params["w1"] * bn_scale).astype(jnp.bfloat16)                   # (E, H) bf16 for MXU
    b1f = ((params["b1"] - params["running_mean"]) * bn_scale
           + params["beta"]).astype(jnp.float32)                           # (1, H)
    w2t = params["w2"].T.astype(jnp.float32)                               # (1, H)
    b2 = params["b2"].reshape((1,)).astype(jnp.float32)                    # (1,) SMEM scalar

    # ---- lane-dense image: flatten BEFORE the bf16 cast (no sublane padding) ----
    img = image.reshape(B, C * HW).astype(jnp.bfloat16)                    # (B, C*HW)

    # ---- batch tiling: tb multiple of 16 (bf16 sublane), ~8 MiB image block ----
    if tb is None:
        row_bytes = C * HW * 2                                 # bf16 row
        tb = (8 << 20) // max(row_bytes, 1)                    # target ~8 MiB / buffer
        tb = max(16, min(1024, (tb // 16) * 16))
        tb = min(tb, max(16, -(-B // 16) * 16))                # don't over-pad tiny batches
        if B >= 32:                                            # keep >=2 grid steps (v7x: 2 TCs)
            tb = min(tb, max(16, (B // 2 // 16) * 16))
    Bp = -(-B // tb) * tb
    if Bp != B:
        img = jnp.pad(img, ((0, Bp - B), (0, 0)))
    grid = (Bp // tb,)

    # ---- VMEM budget: image (2 bufs), weights (2 bufs), intermediates, output ----
    weight_bytes = (w_stem.size * 4 + b_stem.size * 4 + w1f.size * 2
                    + b1f.size * 4 + w2t.size * 4)
    img_block_bytes = tb * C * HW * 2
    interm_bytes = tb * (emb_dim * 6 + hidden * 8 + 8 * 4)     # emb f32+bf16, h, pooled
    vmem_need = (2 * img_block_bytes
                 + 2 * weight_bytes
                 + 2 * tb * OUT_PAD * 4
                 + interm_bytes)
    try:
        phys_vmem = int(pltpu.get_tpu_info().vmem_capacity_bytes)
    except Exception:
        phys_vmem = 64 << 20                                   # conservative (v7x per-TC)
    vmem_ceiling = min(phys_vmem * 7 // 10, 96 << 20)          # ~44 MiB on v7x, ~90 MiB on v5e/v6e
    vmem_limit = int(min(max(vmem_need * 3 // 2, 16 << 20), vmem_ceiling))

    cost = pl.CostEstimate(
        flops=int(Bp * (C * HW + 2 * C * emb_dim + 2 * emb_dim * hidden + 4 * hidden)),
        transcendentals=int(Bp * hidden),
        bytes_accessed=int(img.size * 2 + weight_bytes + Bp * OUT_PAD * 4),
    )

    def _pinned(shape):
        nd = len(shape)
        return pl.BlockSpec(shape, lambda i, _nd=nd: (0,) * _nd)

    in_specs = [
        pl.BlockSpec((tb, C * HW), lambda i: (i, 0), pipeline_mode=pl.Buffered(2)),
        _pinned(w_stem.shape), _pinned(b_stem.shape),
        _pinned(w1f.shape), _pinned(b1f.shape),
        _pinned(w2t.shape),
        pl.BlockSpec(memory_space=pltpu.MemorySpace.SMEM),     # (1,) final bias scalar
    ]
    out_spec = pl.BlockSpec((tb, OUT_PAD), lambda i: (i, 0))

    kernel = functools.partial(effnet_kernel, C=C, HW=HW)
    out = pl.pallas_call(
        kernel,
        out_shape=jax.ShapeDtypeStruct((Bp, OUT_PAD), jnp.float32),
        grid=grid,
        in_specs=in_specs,
        out_specs=out_spec,
        compiler_params=pltpu.CompilerParams(
            dimension_semantics=("parallel",),   # shard batch grid across v7x's 2 TCs
            vmem_limit_bytes=vmem_limit),
        cost_estimate=cost,
    )(img, w_stem, b_stem, w1f, b1f, w2t, b2)

    return out[:B, :OUT_CHANNELS]


def effnet_reference(image, params):
    """Pure-JAX f32 reference (unfolded BN) for numeric validation."""
    B, C, H, W = image.shape
    x = image.reshape(B, C, H * W).astype(jnp.float32)
    pooled = jnp.mean(x, axis=-1)
    emb = pooled @ params["w_stem"] + params["b_stem"]
    h = emb @ params["w1"] + params["b1"]
    inv_std = jax.lax.rsqrt(params["running_var"] + BN_EPS)
    h = (h - params["running_mean"]) * inv_std * params["gamma"] + params["beta"]
    h = h * jax.nn.sigmoid(h)
    return h @ params["w2"] + params["b2"]


if __name__ == "__main__":
    key = jax.random.PRNGKey(0)
    k_img, k_par = jax.random.split(key)
    B, C, H, W = 2, 3, 16, 16
    image = jax.random.normal(k_img, (B, C, H, W), jnp.float32)  # NCHW, like PyTorch
    params = init_params(k_par, C)

    logits = effnet_forward(image, params)
    jax.block_until_ready(logits)
    assert logits.shape == (B, OUT_CHANNELS)

    ref = effnet_reference(image, params)
    assert jnp.all(jnp.isfinite(logits))
    assert jnp.allclose(logits, ref, atol=2e-3, rtol=5e-2), (
        f"mismatch: max abs diff {jnp.max(jnp.abs(logits - ref))}")
    print("KERNEL_OK")
</pallas_src>

<mosaic_0001>
module attributes {stable_mosaic.version = 11 : i64} {
  func.func @effnet_kernel(%arg0: i32, %arg1: memref<16x768xbf16, #tpu.memory_space<vmem>>, %arg2: memref<3x1280xf32, #tpu.memory_space<vmem>>, %arg3: memref<1x1280xf32, #tpu.memory_space<vmem>>, %arg4: memref<1280x128xbf16, #tpu.memory_space<vmem>>, %arg5: memref<1x128xf32, #tpu.memory_space<vmem>>, %arg6: memref<1x128xf32, #tpu.memory_space<vmem>>, %arg7: memref<1xf32, #tpu.memory_space<smem>>, %arg8: memref<16x128xf32, #tpu.memory_space<vmem>>) attributes {dimension_semantics = [#tpu.dimension_semantics<parallel>], iteration_bounds = array<i64: 1>, scalar_prefetch = 0 : i64, scratch_operands = 0 : i64, tpu.core_type = #tpu.core_type<tc>, window_params = [{pipeline_mode = #tpu.pipeline_mode<double_buffered>, transform_indices = @transform_0, window_bounds = array<i64: 16, 768>}, {pipeline_mode = #tpu.pipeline_mode<synchronous>, transform_indices = @transform_1, window_bounds = array<i64: 3, 1280>}, {pipeline_mode = #tpu.pipeline_mode<synchronous>, transform_indices = @transform_2, window_bounds = array<i64: 1, 1280>}, {pipeline_mode = #tpu.pipeline_mode<synchronous>, transform_indices = @transform_3, window_bounds = array<i64: 1280, 128>}, {pipeline_mode = #tpu.pipeline_mode<synchronous>, transform_indices = @transform_4, window_bounds = array<i64: 1, 128>}, {pipeline_mode = #tpu.pipeline_mode<synchronous>, transform_indices = @transform_5, window_bounds = array<i64: 1, 128>}, {transform_indices = @transform_6, window_bounds = array<i64: 1>}, {transform_indices = @transform_7, window_bounds = array<i64: 16, 128>}]} {
    %c0 = arith.constant 0 : index
    %c0_0 = arith.constant 0 : index
    %0 = vector.load %arg1[%c0, %c0_0] : memref<16x768xbf16, #tpu.memory_space<vmem>>, vector<16x256xbf16>
    %1 = arith.extf %0 : vector<16x256xbf16> to vector<16x256xf32>
    %cst = arith.constant dense<0.000000e+00> : vector<16xf32>
    %2 = vector.multi_reduction <add>, %1, %cst [1] : vector<16x256xf32> to vector<16xf32>
    %3 = vector.shape_cast %2 : vector<16xf32> to vector<16x1xf32>
    %c0_1 = arith.constant 0 : index
    %c256 = arith.constant 256 : index
    %4 = vector.load %arg1[%c0_1, %c256] : memref<16x768xbf16, #tpu.memory_space<vmem>>, vector<16x256xbf16>
    %5 = arith.extf %4 : vector<16x256xbf16> to vector<16x256xf32>
    %cst_2 = arith.constant dense<0.000000e+00> : vector<16xf32>
    %6 = vector.multi_reduction <add>, %5, %cst_2 [1] : vector<16x256xf32> to vector<16xf32>
    %7 = vector.shape_cast %6 : vector<16xf32> to vector<16x1xf32>
    %c0_3 = arith.constant 0 : index
    %c512 = arith.constant 512 : index
    %8 = vector.load %arg1[%c0_3, %c512] : memref<16x768xbf16, #tpu.memory_space<vmem>>, vector<16x256xbf16>
    %9 = arith.extf %8 : vector<16x256xbf16> to vector<16x256xf32>
    %cst_4 = arith.constant dense<0.000000e+00> : vector<16xf32>
    %10 = vector.multi_reduction <add>, %9, %cst_4 [1] : vector<16x256xf32> to vector<16xf32>
    %11 = vector.shape_cast %10 : vector<16xf32> to vector<16x1xf32>
    %12 = tpu.concatenate %3, %7, %11 in 1 : vector<16x1xf32>, vector<16x1xf32>, vector<16x1xf32> -> vector<16x3xf32>
    %c0_5 = arith.constant 0 : index
    %c0_6 = arith.constant 0 : index
    %13 = vector.load %arg2[%c0_5, %c0_6] : memref<3x1280xf32, #tpu.memory_space<vmem>>, vector<3x1280xf32>
    %cst_7 = arith.constant dense<0.000000e+00> : vector<16x1280xf32>
    %14 = tpu.matmul %12, %13, %cst_7 {dimension_numbers = #tpu.dot_dimension_numbers<[1], [0], [0], [1], [0, 0, 1, 1], [], []>} : vector<16x3xf32>, vector<3x1280xf32>, vector<16x1280xf32> -> vector<16x1280xf32>
    %c0_8 = arith.constant 0 : index
    %c0_9 = arith.constant 0 : index
    %15 = vector.load %arg3[%c0_8, %c0_9] : memref<1x1280xf32, #tpu.memory_space<vmem>>, vector<1x1280xf32>
    %16 = vector.broadcast %15 : vector<1x1280xf32> to vector<16x1280xf32>
    %17 = arith.addf %14, %16 : vector<16x1280xf32>
    %18 = arith.truncf %17 : vector<16x1280xf32> to vector<16x1280xbf16>
    %c0_10 = arith.constant 0 : index
    %c0_11 = arith.constant 0 : index
    %19 = vector.load %arg4[%c0_10, %c0_11] : memref<1280x128xbf16, #tpu.memory_space<vmem>>, vector<1280x128xbf16>
    %cst_12 = arith.constant dense<0.000000e+00> : vector<16x128xf32>
    %20 = tpu.matmul %18, %19, %cst_12 {dimension_numbers = #tpu.dot_dimension_numbers<[1], [0], [0], [1], [0, 0, 1, 1], [], []>} : vector<16x1280xbf16>, vector<1280x128xbf16>, vector<16x128xf32> -> vector<16x128xf32>
    %c0_13 = arith.constant 0 : index
    %c0_14 = arith.constant 0 : index
    %21 = vector.load %arg5[%c0_13, %c0_14] : memref<1x128xf32, #tpu.memory_space<vmem>>, vector<1x128xf32>
    %22 = vector.broadcast %21 : vector<1x128xf32> to vector<16x128xf32>
    %23 = arith.addf %20, %22 : vector<16x128xf32>
    %24 = arith.negf %23 : vector<16x128xf32>
    %25 = math.exp %24 : vector<16x128xf32>
    %cst_15 = arith.constant 1.000000e+00 : f32
    %26 = vector.broadcast %cst_15 : f32 to vector<16x128xf32>
    %27 = arith.addf %26, %25 : vector<16x128xf32>
    %28 = arith.divf %26, %27 : vector<16x128xf32>
    %29 = arith.mulf %23, %28 : vector<16x128xf32>
    %c0_16 = arith.constant 0 : index
    %c0_17 = arith.constant 0 : index
    %30 = vector.load %arg6[%c0_16, %c0_17] : memref<1x128xf32, #tpu.memory_space<vmem>>, vector<1x128xf32>
    %31 = vector.broadcast %30 : vector<1x128xf32> to vector<16x128xf32>
    %32 = arith.mulf %29, %31 : vector<16x128xf32>
    %cst_18 = arith.constant dense<0.000000e+00> : vector<16xf32>
    %33 = vector.multi_reduction <add>, %32, %cst_18 [1] : vector<16x128xf32> to vector<16xf32>
    %34 = vector.shape_cast %33 : vector<16xf32> to vector<16x1xf32>
    %c0_19 = arith.constant 0 : index
    %35 = memref.load %arg7[%c0_19] : memref<1xf32, #tpu.memory_space<smem>>
    %36 = vector.broadcast %35 : f32 to vector<16x1xf32>
    %37 = arith.addf %34, %36 : vector<16x1xf32>
    %38 = vector.shape_cast %37 : vector<16x1xf32> to vector<16x1xf32>
    %39 = vector.broadcast %38 : vector<16x1xf32> to vector<16x128xf32>
    %c0_20 = arith.constant 0 : index
    %c0_21 = arith.constant 0 : index
    %40 = vector.load %arg8[%c0_20, %c0_21] : memref<16x128xf32, #tpu.memory_space<vmem>>, vector<16x128xf32>
    tpu.vector_store %arg8[%c0_20, %c0_21], %39 {strides = array<i32>} : memref<16x128xf32, #tpu.memory_space<vmem>>, vector<16x128xf32>,
    return
  }
  func.func @transform_0(%arg0: i32) -> (i32, i32) {
    %c0_i32 = arith.constant 0 : i32
    %c0_i32_0 = arith.constant 0 : i32
    return %arg0, %c0_i32 : i32, i32
  }
  func.func @transform_1(%arg0: i32) -> (i32, i32) {
    %c0_i32 = arith.constant 0 : i32
    %c0_i32_0 = arith.constant 0 : i32
    %c0_i32_1 = arith.constant 0 : i32
    return %c0_i32, %c0_i32_0 : i32, i32
  }
  func.func @transform_2(%arg0: i32) -> (i32, i32) {
    %c0_i32 = arith.constant 0 : i32
    %c0_i32_0 = arith.constant 0 : i32
    %c0_i32_1 = arith.constant 0 : i32
    return %c0_i32, %c0_i32_0 : i32, i32
  }
  func.func @transform_3(%arg0: i32) -> (i32, i32) {
    %c0_i32 = arith.constant 0 : i32
    %c0_i32_0 = arith.constant 0 : i32
    %c0_i32_1 = arith.constant 0 : i32
    return %c0_i32, %c0_i32_0 : i32, i32
  }
  func.func @transform_4(%arg0: i32) -> (i32, i32) {
    %c0_i32 = arith.constant 0 : i32
    %c0_i32_0 = arith.constant 0 : i32
    %c0_i32_1 = arith.constant 0 : i32
    return %c0_i32, %c0_i32_0 : i32, i32
  }
  func.func @transform_5(%arg0: i32) -> (i32, i32) {
    %c0_i32 = arith.constant 0 : i32
    %c0_i32_0 = arith.constant 0 : i32
    %c0_i32_1 = arith.constant 0 : i32
    return %c0_i32, %c0_i32_0 : i32, i32
  }
  func.func @transform_6(%arg0: i32) -> i32 {
    %c0_i32 = arith.constant 0 : i32
    %c0_i32_0 = arith.constant 0 : i32
    return %c0_i32 : i32
  }
  func.func @transform_7(%arg0: i32) -> (i32, i32) {
    %c0_i32 = arith.constant 0 : i32
    %c0_i32_0 = arith.constant 0 : i32
    return %arg0, %c0_i32 : i32, i32
  }
}

</mosaic_0001>

<llo_original>
// kernel: tpu_custom_call.1
$region0: #{tpu_custom_call.1}
  #allocation0 [shape = 'u32[]', space=smem, size = 0x4, offset = 0x4, fixed_abs, tag = 'smem constant byte address 0x4 - core index']
  #allocation1 [shape = 'u32[72,128]{1,0:T(1,128)}', space=vmem, size = 0x9000, scoped, tag = 'internal scratch']
  #allocation2 [shape = 'f32[1]{0:T(128)S(6)}', space=smem, size = 0x200, scoped, tag = 'scoped memory for tpu_custom_call.1']
  %s0 = inlined_call_operand.hbm [shape: bf16[16,768], index: 0, kind: input, shape index: {}]
  %s1 = inlined_call_operand.hbm [shape: f32[3,1280], index: 1, kind: input, shape index: {}]
  %s2 = inlined_call_operand.hbm [shape: f32[1,1280], index: 2, kind: input, shape index: {}]
  %s3 = inlined_call_operand.hbm [shape: bf16[1280,128], index: 3, kind: input, shape index: {}]
  %s4 = inlined_call_operand.vmem [shape: f32[1,128], index: 4, kind: input, shape index: {}]
  %s5 = inlined_call_operand.vmem [shape: f32[1,128], index: 5, kind: input, shape index: {}]
  %s6 = inlined_call_operand.<no memory space> [shape: f32[1], index: 6, kind: input, shape index: {}]
  %s7 = inlined_call_operand.hbm [shape: f32[16,128], index: 7, kind: output, shape index: {}]
  %s8 = sld [smem:[#allocation0]]
  $region54: #{tpu_custom_call.1} parent=0
    _
  %s10 = ssub.s32 1, %s8
  %s11 = scalar_select 0, %s10, %s8
  %12 = sst [smem:[#allocation2]] %s6
  $region1: #{tpu_custom_call.1} parent=0
    #allocation3 [shape = 'u8[24576]{0}', space=vmem, size = 0x6000, scoped, tag = 'input window, operand 0, single buffered']
    #allocation4 [shape = 's32[1]{0}', space=sflag, size = 0x4, scoped, tag = 'scoped memory for tpu_custom_call.1']
    #allocation5 [shape = 's32[1]{0}', space=sflag, size = 0x4, scoped, tag = 'scoped memory for tpu_custom_call.1']
    #allocation6 [shape = 'u8[20480]{0}', space=vmem, size = 0x5000, scoped, tag = 'input window, operand 1, single buffered']
    #allocation7 [shape = 's32[1]{0}', space=sflag, size = 0x4, scoped, tag = 'scoped memory for tpu_custom_call.1']
    #allocation8 [shape = 'u8[5120]{0}', space=vmem, size = 0x1400, scoped, tag = 'input window, operand 2, single buffered']
    #allocation9 [shape = 'u8[327680]{0}', space=vmem, size = 0x50000, scoped, tag = 'input window, operand 3, single buffered']
    #allocation10 [shape = 's32[1]{0}', space=sflag, size = 0x4, scoped, tag = 'scoped memory for tpu_custom_call.1']
    #allocation11 [shape = 'u8[8192]{0}', space=vmem, size = 0x2000, scoped, tag = 'output window, operand 0, single buffered']
    %13 = vsyncpa [#allocation4], 0
    %14 = vsyncpa [#allocation7], 0
    %15 = vsyncpa [#allocation10], 0
    %16 = vsyncpa [#allocation5], 0
    // Predicated region
    $region2: #{tpu_custom_call.1} parent=1 // pred_check
      _
    $region3: #{tpu_custom_call.1} parent=1 // pred_check_branch
      %18 = sbr.rel (0) target = $region5
    $region4: #{tpu_custom_call.1} parent=1 // pred_region
      %20 = vsyncadd [#allocation4], 0
      %s21 = sshll.u32 %s0, 4
      %s22 = int_to_ptr.hbm [resolvable:$true] %s21
      %s23 = sshll.u32 [#allocation3], 4
      %s24 = int_to_ptr.vmem [resolvable:$true] %s23
      %29 = dma.hbm_to_vmem [thread:$0]  %s22, 768, %s24, [#allocation4], 384, 384, 24
    $region5: #{tpu_custom_call.1} parent=1 // pred_fallthru
      _
    // Predicated region
    $region6: #{tpu_custom_call.1} parent=1 // pred_check
      _
    $region7: #{tpu_custom_call.1} parent=1 // pred_check_branch
      %31 = sbr.rel (0) target = $region9
    $region8: #{tpu_custom_call.1} parent=1 // pred_region
      %33 = vsyncadd [#allocation7], 0
      %s35 = sshll.u32 %s1, 4
      %s36 = int_to_ptr.hbm [resolvable:$true] %s35
      %s37 = sshll.u32 [#allocation6], 4
      %s38 = int_to_ptr.vmem [resolvable:$true] %s37
      %40 = dma.hbm_to_vmem [thread:$0]  %s36, 640, %s38, [#allocation7]
    $region9: #{tpu_custom_call.1} parent=1 // pred_fallthru
      _
    // Predicated region
    $region10: #{tpu_custom_call.1} parent=1 // pred_check
      _
    $region11: #{tpu_custom_call.1} parent=1 // pred_check_branch
      %42 = sbr.rel (0) target = $region13
    $region12: #{tpu_custom_call.1} parent=1 // pred_region
      %44 = vsyncadd [#allocation7], 0
      %s46 = sshll.u32 %s2, 4
      %s47 = int_to_ptr.hbm [resolvable:$true] %s46
      %s48 = sshll.u32 [#allocation8], 4
      %s49 = int_to_ptr.vmem [resolvable:$true] %s48
      %51 = dma.hbm_to_vmem [thread:$0]  %s47, 160, %s49, [#allocation7]
    $region13: #{tpu_custom_call.1} parent=1 // pred_fallthru
      _
    // Predicated region
    $region14: #{tpu_custom_call.1} parent=1 // pred_check
      _
    $region15: #{tpu_custom_call.1} parent=1 // pred_check_branch
      %53 = sbr.rel (0) target = $region17
    $region16: #{tpu_custom_call.1} parent=1 // pred_region
      %55 = vsyncadd [#allocation10], 0
      %s56 = sshll.u32 %s3, 4
      %s57 = int_to_ptr.hbm [resolvable:$true] %s56
      %s58 = sshll.u32 [#allocation9], 4
      %s59 = int_to_ptr.vmem [resolvable:$true] %s58
      %64 = dma.hbm_to_vmem [thread:$0]  %s57, 10240, %s59, [#allocation10], 64, 64, 4
    $region17: #{tpu_custom_call.1} parent=1 // pred_fallthru
      _
    // Predicated region
    $region18: #{tpu_custom_call.1} parent=1 // pred_check
      _
    $region19: #{tpu_custom_call.1} parent=1 // pred_check_branch
      %66 = sbr.rel (0) target = $region21
    $region20: #{tpu_custom_call.1} parent=1 // pred_region
      _
    $region21: #{tpu_custom_call.1} parent=1 // pred_fallthru
      _
    // Predicated region
    $region22: #{tpu_custom_call.1} parent=1 // pred_check
      _
    $region23: #{tpu_custom_call.1} parent=1 // pred_check_branch
      %68 = sbr.rel (0) target = $region25
    $region24: #{tpu_custom_call.1} parent=1 // pred_region
      _
    $region25: #{tpu_custom_call.1} parent=1 // pred_fallthru
      _
    // Predicated region
    $region26: #{tpu_custom_call.1} parent=1 // pred_check
      _
    $region27: #{tpu_custom_call.1} parent=1 // pred_check_branch
      %70 = sbr.rel (0) target = $region29
    $region28: #{tpu_custom_call.1} parent=1 // pred_region
      _
    $region29: #{tpu_custom_call.1} parent=1 // pred_fallthru
      _
    // Predicated region
    $region30: #{tpu_custom_call.1} parent=1 // pred_check
      _
    $region31: #{tpu_custom_call.1} parent=1 // pred_check_branch
      %72 = sbr.rel (0) target = $region33
    $region32: #{tpu_custom_call.1} parent=1 // pred_region
      %74 = dma.done [#allocation4], 768
    $region33: #{tpu_custom_call.1} parent=1 // pred_fallthru
      _
    // Predicated region
    $region34: #{tpu_custom_call.1} parent=1 // pred_check
      _
    $region35: #{tpu_custom_call.1} parent=1 // pred_check_branch
      %76 = sbr.rel (0) target = $region37
    $region36: #{tpu_custom_call.1} parent=1 // pred_region
      %78 = dma.done [#allocation7], 640
    $region37: #{tpu_custom_call.1} parent=1 // pred_fallthru
      _
    // Predicated region
    $region38: #{tpu_custom_call.1} parent=1 // pred_check
      _
    $region39: #{tpu_custom_call.1} parent=1 // pred_check_branch
      %80 = sbr.rel (0) target = $region41
    $region40: #{tpu_custom_call.1} parent=1 // pred_region
      %82 = dma.done [#allocation7], 160
    $region41: #{tpu_custom_call.1} parent=1 // pred_fallthru
      _
    // Predicated region
    $region42: #{tpu_custom_call.1} parent=1 // pred_check
      _
    $region43: #{tpu_custom_call.1} parent=1 // pred_check_branch
      %84 = sbr.rel (0) target = $region45
    $region44: #{tpu_custom_call.1} parent=1 // pred_region
      %86 = dma.done [#allocation10], 10240
    $region45: #{tpu_custom_call.1} parent=1 // pred_fallthru
      _
    %v87 = vld [vmem:[#allocation3] sm:$0xff]
    %v88 = vld [vmem:[#allocation3 + $0x18] sm:$0xff]
    %v89 = vunpack.c.l.bf16 %v87
    %v90 = vunpack.c.h.bf16 %v87
    %v91 = vunpack.c.l.bf16 %v88
    %v92 = vunpack.c.h.bf16 %v88
    %v93 = vadd.f32 %v89, %v90
    %94 = vadd.xlane.f32.xlu0 %v93
    %v95 = vpop.xlane.xlu0 %94
    %v96 = vadd.f32 %v91, %v92
    %97 = vadd.xlane.f32.xlu0 %v96
    %v98 = vpop.xlane.xlu0 %97
    %v99 = vld [vmem:[#allocation3 + $0x8] sm:$0xff]
    %v100 = vld [vmem:[#allocation3 + $0x20] sm:$0xff]
    %v101 = vunpack.c.l.bf16 %v99
    %v102 = vunpack.c.h.bf16 %v99
    %v103 = vunpack.c.l.bf16 %v100
    %v104 = vunpack.c.h.bf16 %v100
    %v105 = vadd.f32 %v101, %v102
    %106 = vadd.xlane.f32.xlu0 %v105
    %v107 = vpop.xlane.xlu0 %106
    %v108 = vadd.f32 %v103, %v104
    %109 = vadd.xlane.f32.xlu0 %v108
    %v110 = vpop.xlane.xlu0 %109
    %v111 = vld [vmem:[#allocation3 + $0x10] sm:$0xff]
    %v112 = vld [vmem:[#allocation3 + $0x28] sm:$0xff]
    %v113 = vunpack.c.l.bf16 %v111
    %v114 = vunpack.c.h.bf16 %v111
    %v115 = vunpack.c.l.bf16 %v112
    %v116 = vunpack.c.h.bf16 %v112
    %v117 = vadd.f32 %v113, %v114
    %118 = vadd.xlane.f32.xlu0 %v117
    %v119 = vpop.xlane.xlu0 %118
    %v120 = vadd.f32 %v115, %v116
    %121 = vadd.xlane.f32.xlu0 %v120
    %v122 = vpop.xlane.xlu0 %121
    %vm123 = vcmask 7168
    %v124 = vsel %vm123, %v95, %v107
    %v125 = vsel %vm123, %v98, %v110
    %vm126 = vcmask 15360
    %v127 = vsel %vm126, %v124, %v119
    %v128 = vsel %vm126, %v125, %v122
    %v129 = vld [vmem:[#allocation6] sm:$0x77]
    %v130 = vld [vmem:[#allocation6 + $0x8] sm:$0x77]
    %v131 = vld [vmem:[#allocation6 + $0x10] sm:$0x77]
    %v132 = vld [vmem:[#allocation6 + $0x18] sm:$0x77]
    %v133 = vld [vmem:[#allocation6 + $0x20] sm:$0x77]
    %v134 = vld [vmem:[#allocation8] sm:$0xff]
    %v135 = vld [vmem:[#allocation8 + $0x8] sm:$0x3]
    %v138 = vperm.slane %v134, 0
    %v139 = vperm.slane %v134, 1
    %v140 = vperm.slane %v134, 2
    %v141 = vperm.slane %v134, 3
    %v142 = vperm.slane %v134, 4
    %v143 = vperm.slane %v134, 5
    %v144 = vperm.slane %v134, 6
    %v145 = vperm.slane %v134, 7
    %v146 = vperm.slane %v135, 0
    %v147 = vperm.slane %v135, 1
    %163 = vst [vmem:[#allocation1] ss:$2 sm:$0xff] %v129
    %s164 = scalar_lea.vmem [#allocation1], 16
    %165 = vst [vmem:[%s164] ss:$2 sm:$0xff] %v130
    %s166 = scalar_lea.vmem [#allocation1], 32
    %167 = vst [vmem:[%s166] ss:$2 sm:$0xff] %v131
    %s168 = scalar_lea.vmem [#allocation1], 48
    %169 = vst [vmem:[%s168] ss:$2 sm:$0xff] %v132
    %v170 = vld.sshfl [vmem:[#allocation1] sm:$0xff pattern:$0x75316420]
    %v171 = vld.sshfl [vmem:[#allocation1 + $0x8] sm:$0xff pattern:$0x75316420]
    %v172 = vld.sshfl [vmem:[#allocation1 + $0x10] sm:$0xff pattern:$0x75316420]
    %v173 = vld.sshfl [vmem:[#allocation1 + $0x18] sm:$0xff pattern:$0x75316420]
    %v174 = vld.sshfl [vmem:[#allocation1 + $0x20] sm:$0xff pattern:$0x75316420]
    %v175 = vld.sshfl [vmem:[#allocation1 + $0x28] sm:$0xff pattern:$0x75316420]
    %v176 = vld.sshfl [vmem:[#allocation1 + $0x30] sm:$0xff pattern:$0x75316420]
    %v177 = vld.sshfl [vmem:[#allocation1 + $0x38] sm:$0xff pattern:$0x75316420]
    %178 = vst [vmem:[#allocation1] ss:$2 sm:$0xff] %v133
    %v179 = vld.sshfl [vmem:[#allocation1] sm:$0xff pattern:$0x75316420]
    %v180 = vld.sshfl [vmem:[#allocation1 + $0x8] sm:$0xff pattern:$0x75316420]
    %vm181 = vcmask 23552
    %v183 = vsel %vm181, %v127, 0
    %v186 = vsel %vm181, %v128, 0
    %vm188 = vcmask 1042432
    %v189 = vsel %vm188, %v170, 0
    %v191 = vsel %vm188, %v171, 0
    %v193 = vsel %vm188, %v172, 0
    %v195 = vsel %vm188, %v173, 0
    %v197 = vsel %vm188, %v174, 0
    %v199 = vsel %vm188, %v175, 0
    %v201 = vsel %vm188, %v176, 0
    %v203 = vsel %vm188, %v177, 0
    %v205 = vsel %vm188, %v179, 0
    %v207 = vsel %vm188, %v180, 0
    %209 = vmatpush.msra.mxu0 0.0
    %210 = vmatpush.msra.mxu0 0.0
    %211 = vmatpush.msra.mxu0 0.0
    %212 = vmatpush.msra.mxu0 0.0
    %213 = vmatpush.msra.mxu0 0.0
    %214 = vmatpush.msra.mxu0 0.0
    %215 = vmatpush.msra.mxu0 0.0
    %216 = vmatpush.msra.mxu0 0.0
    %217 = vmatpush.msra.mxu0 0.0
    %218 = vmatpush.msra.mxu0 0.0
    %219 = vmatpush.msra.mxu0 0.0
    %220 = vmatpush.msra.mxu0 0.0
    %221 = vmatpush.msra.mxu0 0.0
    %222 = vmatpush.msra.mxu0 0.0
    %223 = vmatpush.msra.mxu0 0.0
    %224 = vmatpush.msra.mxu0 %v189
    %225 = vmatmul.f32.gmra.mxu0 %v183
    %v226 = vpop.f32.mrf.mxu0
    %v227 = vadd.f32 %v138, %v226
    %228 = vmatmul.f32.gmra.mxu0 %v186
    %v229 = vpop.f32.mrf.mxu0
    %v230 = vadd.f32 %v138, %v229
    %231 = vdwg.mxu0
    %232 = vmatpush.msra.mxu0 0.0
    %233 = vmatpush.msra.mxu0 0.0
    %234 = vmatpush.msra.mxu0 0.0
    %235 = vmatpush.msra.mxu0 0.0
    %236 = vmatpush.msra.mxu0 0.0
    %237 = vmatpush.msra.mxu0 0.0
    %238 = vmatpush.msra.mxu0 0.0
    %239 = vmatpush.msra.mxu0 0.0
    %240 = vmatpush.msra.mxu0 0.0
    %241 = vmatpush.msra.mxu0 0.0
    %242 = vmatpush.msra.mxu0 0.0
    %243 = vmatpush.msra.mxu0 0.0
    %244 = vmatpush.msra.mxu0 0.0
    %245 = vmatpush.msra.mxu0 0.0
    %246 = vmatpush.msra.mxu0 0.0
    %247 = vmatpush.msra.mxu0 %v191
    %248 = vmatmul.f32.gmra.mxu0 %v183
    %v249 = vpop.f32.mrf.mxu0
    %v250 = vadd.f32 %v139, %v249
    %251 = vmatmul.f32.gmra.mxu0 %v186
    %v252 = vpop.f32.mrf.mxu0
    %v253 = vadd.f32 %v139, %v252
    %254 = vdwg.mxu0
    %255 = vmatpush.msra.mxu0 0.0
    %256 = vmatpush.msra.mxu0 0.0
    %257 = vmatpush.msra.mxu0 0.0
    %258 = vmatpush.msra.mxu0 0.0
    %259 = vmatpush.msra.mxu0 0.0
    %260 = vmatpush.msra.mxu0 0.0
    %261 = vmatpush.msra.mxu0 0.0
    %262 = vmatpush.msra.mxu0 0.0
    %263 = vmatpush.msra.mxu0 0.0
    %264 = vmatpush.msra.mxu0 0.0
    %265 = vmatpush.msra.mxu0 0.0
    %266 = vmatpush.msra.mxu0 0.0
    %267 = vmatpush.msra.mxu0 0.0
    %268 = vmatpush.msra.mxu0 0.0
    %269 = vmatpush.msra.mxu0 0.0
    %270 = vmatpush.msra.mxu0 %v193
    %271 = vmatmul.f32.gmra.mxu0 %v183
    %v272 = vpop.f32.mrf.mxu0
    %v273 = vadd.f32 %v140, %v272
    %274 = vmatmul.f32.gmra.mxu0 %v186
    %v275 = vpop.f32.mrf.mxu0
    %v276 = vadd.f32 %v140, %v275
    %277 = vdwg.mxu0
    %278 = vmatpush.msra.mxu0 0.0
    %279 = vmatpush.msra.mxu0 0.0
    %280 = vmatpush.msra.mxu0 0.0
    %281 = vmatpush.msra.mxu0 0.0
    %282 = vmatpush.msra.mxu0 0.0
    %283 = vmatpush.msra.mxu0 0.0
    %284 = vmatpush.msra.mxu0 0.0
    %285 = vmatpush.msra.mxu0 0.0
    %286 = vmatpush.msra.mxu0 0.0
    %287 = vmatpush.msra.mxu0 0.0
    %288 = vmatpush.msra.mxu0 0.0
    %289 = vmatpush.msra.mxu0 0.0
    %290 = vmatpush.msra.mxu0 0.0
    %291 = vmatpush.msra.mxu0 0.0
    %292 = vmatpush.msra.mxu0 0.0
    %293 = vmatpush.msra.mxu0 %v195
    %294 = vmatmul.f32.gmra.mxu0 %v183
    %v295 = vpop.f32.mrf.mxu0
    %v296 = vadd.f32 %v141, %v295
    %297 = vmatmul.f32.gmra.mxu0 %v186
    %v298 = vpop.f32.mrf.mxu0
    %v299 = vadd.f32 %v141, %v298
    %300 = vdwg.mxu0
    %301 = vmatpush.msra.mxu0 0.0
    %302 = vmatpush.msra.mxu0 0.0
    %303 = vmatpush.msra.mxu0 0.0
    %304 = vmatpush.msra.mxu0 0.0
    %305 = vmatpush.msra.mxu0 0.0
    %306 = vmatpush.msra.mxu0 0.0
    %307 = vmatpush.msra.mxu0 0.0
    %308 = vmatpush.msra.mxu0 0.0
    %309 = vmatpush.msra.mxu0 0.0
    %310 = vmatpush.msra.mxu0 0.0
    %311 = vmatpush.msra.mxu0 0.0
    %312 = vmatpush.msra.mxu0 0.0
    %313 = vmatpush.msra.mxu0 0.0
    %314 = vmatpush.msra.mxu0 0.0
    %315 = vmatpush.msra.mxu0 0.0
    %316 = vmatpush.msra.mxu0 %v197
    %317 = vmatmul.f32.gmra.mxu0 %v183
    %v318 = vpop.f32.mrf.mxu0
    %v319 = vadd.f32 %v142, %v318
    %320 = vmatmul.f32.gmra.mxu0 %v186
    %v321 = vpop.f32.mrf.mxu0
    %v322 = vadd.f32 %v142, %v321
    %323 = vdwg.mxu0
    %324 = vmatpush.msra.mxu0 0.0
    %325 = vmatpush.msra.mxu0 0.0
    %326 = vmatpush.msra.mxu0 0.0
    %327 = vmatpush.msra.mxu0 0.0
    %328 = vmatpush.msra.mxu0 0.0
    %329 = vmatpush.msra.mxu0 0.0
    %330 = vmatpush.msra.mxu0 0.0
    %331 = vmatpush.msra.mxu0 0.0
    %332 = vmatpush.msra.mxu0 0.0
    %333 = vmatpush.msra.mxu0 0.0
    %334 = vmatpush.msra.mxu0 0.0
    %335 = vmatpush.msra.mxu0 0.0
    %336 = vmatpush.msra.mxu0 0.0
    %337 = vmatpush.msra.mxu0 0.0
    %338 = vmatpush.msra.mxu0 0.0
    %339 = vmatpush.msra.mxu0 %v199
    %340 = vmatmul.f32.gmra.mxu0 %v183
    %v341 = vpop.f32.mrf.mxu0
    %v342 = vadd.f32 %v143, %v341
    %343 = vmatmul.f32.gmra.mxu0 %v186
    %v344 = vpop.f32.mrf.mxu0
    %v345 = vadd.f32 %v143, %v344
    %346 = vdwg.mxu0
    %347 = vmatpush.msra.mxu0 0.0
    %348 = vmatpush.msra.mxu0 0.0
    %349 = vmatpush.msra.mxu0 0.0
    %350 = vmatpush.msra.mxu0 0.0
    %351 = vmatpush.msra.mxu0 0.0
    %352 = vmatpush.msra.mxu0 0.0
    %353 = vmatpush.msra.mxu0 0.0
    %354 = vmatpush.msra.mxu0 0.0
    %355 = vmatpush.msra.mxu0 0.0
    %356 = vmatpush.msra.mxu0 0.0
    %357 = vmatpush.msra.mxu0 0.0
    %358 = vmatpush.msra.mxu0 0.0
    %359 = vmatpush.msra.mxu0 0.0
    %360 = vmatpush.msra.mxu0 0.0
    %361 = vmatpush.msra.mxu0 0.0
    %362 = vmatpush.msra.mxu0 %v201
    %363 = vmatmul.f32.gmra.mxu0 %v183
    %v364 = vpop.f32.mrf.mxu0
    %v365 = vadd.f32 %v144, %v364
    %366 = vmatmul.f32.gmra.mxu0 %v186
    %v367 = vpop.f32.mrf.mxu0
    %v368 = vadd.f32 %v144, %v367
    %369 = vdwg.mxu0
    %370 = vmatpush.msra.mxu0 0.0
    %371 = vmatpush.msra.mxu0 0.0
    %372 = vmatpush.msra.mxu0 0.0
    %373 = vmatpush.msra.mxu0 0.0
    %374 = vmatpush.msra.mxu0 0.0
    %375 = vmatpush.msra.mxu0 0.0
    %376 = vmatpush.msra.mxu0 0.0
    %377 = vmatpush.msra.mxu0 0.0
    %378 = vmatpush.msra.mxu0 0.0
    %379 = vmatpush.msra.mxu0 0.0
    %380 = vmatpush.msra.mxu0 0.0
    %381 = vmatpush.msra.mxu0 0.0
    %382 = vmatpush.msra.mxu0 0.0
    %383 = vmatpush.msra.mxu0 0.0
    %384 = vmatpush.msra.mxu0 0.0
    %385 = vmatpush.msra.mxu0 %v203
    %386 = vmatmul.f32.gmra.mxu0 %v183
    %v387 = vpop.f32.mrf.mxu0
    %v388 = vadd.f32 %v145, %v387
    %389 = vmatmul.f32.gmra.mxu0 %v186
    %v390 = vpop.f32.mrf.mxu0
    %v391 = vadd.f32 %v145, %v390
    %392 = vdwg.mxu0
    %393 = vmatpush.msra.mxu0 0.0
    %394 = vmatpush.msra.mxu0 0.0
    %395 = vmatpush.msra.mxu0 0.0
    %396 = vmatpush.msra.mxu0 0.0
    %397 = vmatpush.msra.mxu0 0.0
    %398 = vmatpush.msra.mxu0 0.0
    %399 = vmatpush.msra.mxu0 0.0
    %400 = vmatpush.msra.mxu0 0.0
    %401 = vmatpush.msra.mxu0 0.0
    %402 = vmatpush.msra.mxu0 0.0
    %403 = vmatpush.msra.mxu0 0.0
    %404 = vmatpush.msra.mxu0 0.0
    %405 = vmatpush.msra.mxu0 0.0
    %406 = vmatpush.msra.mxu0 0.0
    %407 = vmatpush.msra.mxu0 0.0
    %408 = vmatpush.msra.mxu0 %v205
    %409 = vmatmul.f32.gmra.mxu0 %v183
    %v410 = vpop.f32.mrf.mxu0
    %v411 = vadd.f32 %v146, %v410
    %412 = vmatmul.f32.gmra.mxu0 %v186
    %v413 = vpop.f32.mrf.mxu0
    %v414 = vadd.f32 %v146, %v413
    %415 = vdwg.mxu0
    %416 = vmatpush.msra.mxu0 0.0
    %417 = vmatpush.msra.mxu0 0.0
    %418 = vmatpush.msra.mxu0 0.0
    %419 = vmatpush.msra.mxu0 0.0
    %420 = vmatpush.msra.mxu0 0.0
    %421 = vmatpush.msra.mxu0 0.0
    %422 = vmatpush.msra.mxu0 0.0
    %423 = vmatpush.msra.mxu0 0.0
    %424 = vmatpush.msra.mxu0 0.0
    %425 = vmatpush.msra.mxu0 0.0
    %426 = vmatpush.msra.mxu0 0.0
    %427 = vmatpush.msra.mxu0 0.0
    %428 = vmatpush.msra.mxu0 0.0
    %429 = vmatpush.msra.mxu0 0.0
    %430 = vmatpush.msra.mxu0 0.0
    %431 = vmatpush.msra.mxu0 %v207
    %432 = vmatmul.f32.gmra.mxu0 %v183
    %v433 = vpop.f32.mrf.mxu0
    %v434 = vadd.f32 %v147, %v433
    %435 = vmatmul.f32.gmra.mxu0 %v186
    %v436 = vpop.f32.mrf.mxu0
    %v437 = vadd.f32 %v147, %v436
    %438 = vdwg.mxu0
    %v439 = vpack.c.bf16 %v230, %v227
    %v440 = vpack.c.bf16 %v253, %v250
    %v441 = vpack.c.bf16 %v276, %v273
    %v442 = vpack.c.bf16 %v299, %v296
    %v443 = vpack.c.bf16 %v322, %v319
    %v444 = vpack.c.bf16 %v345, %v342
    %v445 = vpack.c.bf16 %v368, %v365
    %v446 = vpack.c.bf16 %v391, %v388
    %v447 = vpack.c.bf16 %v414, %v411
    %v448 = vpack.c.bf16 %v437, %v434
    %v449 = vld [vmem:[#allocation9] sm:$0xf]
    %v450 = vld [vmem:[#allocation9 + $0x4] sm:$0xf]
    %v451 = vld [vmem:[#allocation9 + $0x8] sm:$0xf]
    %v452 = vld [vmem:[#allocation9 + $0xc] sm:$0xf]
    %v453 = vld [vmem:[#allocation9 + $0x10] sm:$0xf]
    %v454 = vld [vmem:[#allocation9 + $0x14] sm:$0xf]
    %v455 = vld [vmem:[#allocation9 + $0x18] sm:$0xf]
    %v456 = vld [vmem:[#allocation9 + $0x1c] sm:$0xf]
    %v457 = vld [vmem:[#allocation9 + $0x20] sm:$0xf]
    %v458 = vld [vmem:[#allocation9 + $0x24] sm:$0xf]
    %v459 = vld [vmem:[#allocation9 + $0x28] sm:$0xf]
    %v460 = vld [vmem:[#allocation9 + $0x2c] sm:$0xf]
    %v461 = vld [vmem:[#allocation9 + $0x30] sm:$0xf]
    %v462 = vld [vmem:[#allocation9 + $0x34] sm:$0xf]
    %v463 = vld [vmem:[#allocation9 + $0x38] sm:$0xf]
    %v464 = vld [vmem:[#allocation9 + $0x3c] sm:$0xf]
    %v465 = vld [vmem:[#allocation9 + $0x40] sm:$0xf]
    %v466 = vld [vmem:[#allocation9 + $0x44] sm:$0xf]
    %v467 = vld [vmem:[#allocation9 + $0x48] sm:$0xf]
    %v468 = vld [vmem:[#allocation9 + $0x4c] sm:$0xf]
    %v469 = vld [vmem:[#allocation9 + $0x50] sm:$0xf]
    %v470 = vld [vmem:[#allocation9 + $0x54] sm:$0xf]
    %v471 = vld [vmem:[#allocation9 + $0x58] sm:$0xf]
    %v472 = vld [vmem:[#allocation9 + $0x5c] sm:$0xf]
    %v473 = vld [vmem:[#allocation9 + $0x60] sm:$0xf]
    %v474 = vld [vmem:[#allocation9 + $0x64] sm:$0xf]
    %v475 = vld [vmem:[#allocation9 + $0x68] sm:$0xf]
    %v476 = vld [vmem:[#allocation9 + $0x6c] sm:$0xf]
    %v477 = vld [vmem:[#allocation9 + $0x70] sm:$0xf]
    %v478 = vld [vmem:[#allocation9 + $0x74] sm:$0xf]
    %v479 = vld [vmem:[#allocation9 + $0x78] sm:$0xf]
    %v480 = vld [vmem:[#allocation9 + $0x7c] sm:$0xf]
    %v481 = vld [vmem:[#allocation9 + $0x80] sm:$0xf]
    %v482 = vld [vmem:[#allocation9 + $0x84] sm:$0xf]
    %v483 = vld [vmem:[#allocation9 + $0x88] sm:$0xf]
    %v484 = vld [vmem:[#allocation9 + $0x8c] sm:$0xf]
    %v485 = vld [vmem:[#allocation9 + $0x90] sm:$0xf]
    %v486 = vld [vmem:[#allocation9 + $0x94] sm:$0xf]
    %v487 = vld [vmem:[#allocation9 + $0x98] sm:$0xf]
    %v488 = vld [vmem:[#allocation9 + $0x9c] sm:$0xf]
    %v489 = vld [vmem:[#allocation9 + $0xa0] sm:$0xf]
    %v490 = vld [vmem:[#allocation9 + $0xa4] sm:$0xf]
    %v491 = vld [vmem:[#allocation9 + $0xa8] sm:$0xf]
    %v492 = vld [vmem:[#allocation9 + $0xac] sm:$0xf]
    %v493 = vld [vmem:[#allocation9 + $0xb0] sm:$0xf]
    %v494 = vld [vmem:[#allocation9 + $0xb4] sm:$0xf]
    %v495 = vld [vmem:[#allocation9 + $0xb8] sm:$0xf]
    %v496 = vld [vmem:[#allocation9 + $0xbc] sm:$0xf]
    %v497 = vld [vmem:[#allocation9 + $0xc0] sm:$0xf]
    %v498 = vld [vmem:[#allocation9 + $0xc4] sm:$0xf]
    %v499 = vld [vmem:[#allocation9 + $0xc8] sm:$0xf]
    %v500 = vld [vmem:[#allocation9 + $0xcc] sm:$0xf]
    %v501 = vld [vmem:[#allocation9 + $0xd0] sm:$0xf]
    %v502 = vld [vmem:[#allocation9 + $0xd4] sm:$0xf]
    %v503 = vld [vmem:[#allocation9 + $0xd8] sm:$0xf]
    %v504 = vld [vmem:[#allocation9 + $0xdc] sm:$0xf]
    %v505 = vld [vmem:[#allocation9 + $0xe0] sm:$0xf]
    %v506 = vld [vmem:[#allocation9 + $0xe4] sm:$0xf]
    %v507 = vld [vmem:[#allocation9 + $0xe8] sm:$0xf]
    %v508 = vld [vmem:[#allocation9 + $0xec] sm:$0xf]
    %v509 = vld [vmem:[#allocation9 + $0xf0] sm:$0xf]
    %v510 = vld [vmem:[#allocation9 + $0xf4] sm:$0xf]
    %v511 = vld [vmem:[#allocation9 + $0xf8] sm:$0xf]
    %v512 = vld [vmem:[#allocation9 + $0xfc] sm:$0xf]
    %v513 = vld [vmem:[#allocation9 + $0x100] sm:$0xf]
    %v514 = vld [vmem:[#allocation9 + $0x104] sm:$0xf]
    %v515 = vld [vmem:[#allocation9 + $0x108] sm:$0xf]
    %v516 = vld [vmem:[#allocation9 + $0x10c] sm:$0xf]
    %v517 = vld [vmem:[#allocation9 + $0x110] sm:$0xf]
    %v518 = vld [vmem:[#allocation9 + $0x114] sm:$0xf]
    %v519 = vld [vmem:[#allocation9 + $0x118] sm:$0xf]
    %v520 = vld [vmem:[#allocation9 + $0x11c] sm:$0xf]
    %v521 = vld [vmem:[#allocation9 + $0x120] sm:$0xf]
    %v522 = vld [vmem:[#allocation9 + $0x124] sm:$0xf]
    %v523 = vld [vmem:[#allocation9 + $0x128] sm:$0xf]
    %v524 = vld [vmem:[#allocation9 + $0x12c] sm:$0xf]
    %v525 = vld [vmem:[#allocation9 + $0x130] sm:$0xf]
    %v526 = vld [vmem:[#allocation9 + $0x134] sm:$0xf]
    %v527 = vld [vmem:[#allocation9 + $0x138] sm:$0xf]
    %v528 = vld [vmem:[#allocation9 + $0x13c] sm:$0xf]
    %v529 = vld [vmem:[#allocation9 + $0x140] sm:$0xf]
    %v530 = vld [vmem:[#allocation9 + $0x144] sm:$0xf]
    %v531 = vld [vmem:[#allocation9 + $0x148] sm:$0xf]
    %v532 = vld [vmem:[#allocation9 + $0x14c] sm:$0xf]
    %v533 = vld [vmem:[#allocation9 + $0x150] sm:$0xf]
    %v534 = vld [vmem:[#allocation9 + $0x154] sm:$0xf]
    %v535 = vld [vmem:[#allocation9 + $0x158] sm:$0xf]
    %v536 = vld [vmem:[#allocation9 + $0x15c] sm:$0xf]
    %v537 = vld [vmem:[#allocation9 + $0x160] sm:$0xf]
    %v538 = vld [vmem:[#allocation9 + $0x164] sm:$0xf]
    %v539 = vld [vmem:[#allocation9 + $0x168] sm:$0xf]
    %v540 = vld [vmem:[#allocation9 + $0x16c] sm:$0xf]
    %v541 = vld [vmem:[#allocation9 + $0x170] sm:$0xf]
    %v542 = vld [vmem:[#allocation9 + $0x174] sm:$0xf]
    %v543 = vld [vmem:[#allocation9 + $0x178] sm:$0xf]
    %v544 = vld [vmem:[#allocation9 + $0x17c] sm:$0xf]
    %v545 = vld [vmem:[#allocation9 + $0x180] sm:$0xf]
    %v546 = vld [vmem:[#allocation9 + $0x184] sm:$0xf]
    %v547 = vld [vmem:[#allocation9 + $0x188] sm:$0xf]
    %v548 = vld [vmem:[#allocation9 + $0x18c] sm:$0xf]
    %v549 = vld [vmem:[#allocation9 + $0x190] sm:$0xf]
    %v550 = vld [vmem:[#allocation9 + $0x194] sm:$0xf]
    %v551 = vld [vmem:[#allocation9 + $0x198] sm:$0xf]
    %v552 = vld [vmem:[#allocation9 + $0x19c] sm:$0xf]
    %v553 = vld [vmem:[#allocation9 + $0x1a0] sm:$0xf]
    %v554 = vld [vmem:[#allocation9 + $0x1a4] sm:$0xf]
    %v555 = vld [vmem:[#allocation9 + $0x1a8] sm:$0xf]
    %v556 = vld [vmem:[#allocation9 + $0x1ac] sm:$0xf]
    %v557 = vld [vmem:[#allocation9 + $0x1b0] sm:$0xf]
    %v558 = vld [vmem:[#allocation9 + $0x1b4] sm:$0xf]
    %v559 = vld [vmem:[#allocation9 + $0x1b8] sm:$0xf]
    %v560 = vld [vmem:[#allocation9 + $0x1bc] sm:$0xf]
    %v561 = vld [vmem:[#allocation9 + $0x1c0] sm:$0xf]
    %v562 = vld [vmem:[#allocation9 + $0x1c4] sm:$0xf]
    %v563 = vld [vmem:[#allocation9 + $0x1c8] sm:$0xf]
    %v564 = vld [vmem:[#allocation9 + $0x1cc] sm:$0xf]
    %v565 = vld [vmem:[#allocation9 + $0x1d0] sm:$0xf]
    %v566 = vld [vmem:[#allocation9 + $0x1d4] sm:$0xf]
    %v567 = vld [vmem:[#allocation9 + $0x1d8] sm:$0xf]
    %v568 = vld [vmem:[#allocation9 + $0x1dc] sm:$0xf]
    %v569 = vld [vmem:[#allocation9 + $0x1e0] sm:$0xf]
    %v570 = vld [vmem:[#allocation9 + $0x1e4] sm:$0xf]
    %v571 = vld [vmem:[#allocation9 + $0x1e8] sm:$0xf]
    %v572 = vld [vmem:[#allocation9 + $0x1ec] sm:$0xf]
    %v573 = vld [vmem:[#allocation9 + $0x1f0] sm:$0xf]
    %v574 = vld [vmem:[#allocation9 + $0x1f4] sm:$0xf]
    %v575 = vld [vmem:[#allocation9 + $0x1f8] sm:$0xf]
    %v576 = vld [vmem:[#allocation9 + $0x1fc] sm:$0xf]
    %v577 = vld [vmem:[#allocation9 + $0x200] sm:$0xf]
    %v578 = vld [vmem:[#allocation9 + $0x204] sm:$0xf]
    %v579 = vld [vmem:[#allocation9 + $0x208] sm:$0xf]
    %v580 = vld [vmem:[#allocation9 + $0x20c] sm:$0xf]
    %v581 = vld [vmem:[#allocation9 + $0x210] sm:$0xf]
    %v582 = vld [vmem:[#allocation9 + $0x214] sm:$0xf]
    %v583 = vld [vmem:[#allocation9 + $0x218] sm:$0xf]
    %v584 = vld [vmem:[#allocation9 + $0x21c] sm:$0xf]
    %v585 = vld [vmem:[#allocation9 + $0x220] sm:$0xf]
    %v586 = vld [vmem:[#allocation9 + $0x224] sm:$0xf]
    %v587 = vld [vmem:[#allocation9 + $0x228] sm:$0xf]
    %v588 = vld [vmem:[#allocation9 + $0x22c] sm:$0xf]
    %v589 = vld [vmem:[#allocation9 + $0x230] sm:$0xf]
    %v590 = vld [vmem:[#allocation9 + $0x234] sm:$0xf]
    %v591 = vld [vmem:[#allocation9 + $0x238] sm:$0xf]
    %v592 = vld [vmem:[#allocation9 + $0x23c] sm:$0xf]
    %v593 = vld [vmem:[#allocation9 + $0x240] sm:$0xf]
    %v594 = vld [vmem:[#allocation9 + $0x244] sm:$0xf]
    %v595 = vld [vmem:[#allocation9 + $0x248] sm:$0xf]
    %v596 = vld [vmem:[#allocation9 + $0x24c] sm:$0xf]
    %v597 = vld [vmem:[#allocation9 + $0x250] sm:$0xf]
    %v598 = vld [vmem:[#allocation9 + $0x254] sm:$0xf]
    %v599 = vld [vmem:[#allocation9 + $0x258] sm:$0xf]
    %v600 = vld [vmem:[#allocation9 + $0x25c] sm:$0xf]
    %v601 = vld [vmem:[#allocation9 + $0x260] sm:$0xf]
    %v602 = vld [vmem:[#allocation9 + $0x264] sm:$0xf]
    %v603 = vld [vmem:[#allocation9 + $0x268] sm:$0xf]
    %v604 = vld [vmem:[#allocation9 + $0x26c] sm:$0xf]
    %v605 = vld [vmem:[#allocation9 + $0x270] sm:$0xf]
    %v606 = vld [vmem:[#allocation9 + $0x274] sm:$0xf]
    %v607 = vld [vmem:[#allocation9 + $0x278] sm:$0xf]
    %v608 = vld [vmem:[#allocation9 + $0x27c] sm:$0xf]
    %v609 = vld [vmem:[%s4] sm:$0x1]
    %v611 = vperm.slane %v609, 0
    %v773 = vunpack.c.l.b16 %v449
    %v774 = vunpack.c.l.b16 %v450
    %v775 = vunpack.c.l.b16 %v451
    %v776 = vunpack.c.l.b16 %v452
    %v777 = vunpack.c.l.b16 %v453
    %v778 = vunpack.c.l.b16 %v454
    %v779 = vunpack.c.l.b16 %v455
    %v780 = vunpack.c.l.b16 %v456
    %v781 = vunpack.c.l.b16 %v457
    %v782 = vunpack.c.l.b16 %v458
    %v783 = vunpack.c.l.b16 %v459
    %v784 = vunpack.c.l.b16 %v460
    %v785 = vunpack.c.l.b16 %v461
    %v786 = vunpack.c.l.b16 %v462
    %v787 = vunpack.c.l.b16 %v463
    %v788 = vunpack.c.l.b16 %v464
    %v789 = vunpack.c.l.b16 %v465
    %v790 = vunpack.c.l.b16 %v466
    %v791 = vunpack.c.l.b16 %v467
    %v792 = vunpack.c.l.b16 %v468
    %v793 = vunpack.c.l.b16 %v469
    %v794 = vunpack.c.l.b16 %v470
    %v795 = vunpack.c.l.b16 %v471
    %v796 = vunpack.c.l.b16 %v472
    %v797 = vunpack.c.l.b16 %v473
    %v798 = vunpack.c.l.b16 %v474
    %v799 = vunpack.c.l.b16 %v475
    %v800 = vunpack.c.l.b16 %v476
    %v801 = vunpack.c.l.b16 %v477
    %v802 = vunpack.c.l.b16 %v478
    %v803 = vunpack.c.l.b16 %v479
    %v804 = vunpack.c.l.b16 %v480
    %v805 = vunpack.c.l.b16 %v481
    %v806 = vunpack.c.l.b16 %v482
    %v807 = vunpack.c.l.b16 %v483
    %v808 = vunpack.c.l.b16 %v484
    %v809 = vunpack.c.l.b16 %v485
    %v810 = vunpack.c.l.b16 %v486
    %v811 = vunpack.c.l.b16 %v487
    %v812 = vunpack.c.l.b16 %v488
    %v813 = vunpack.c.l.b16 %v489
    %v814 = vunpack.c.l.b16 %v490
    %v815 = vunpack.c.l.b16 %v491
    %v816 = vunpack.c.l.b16 %v492
    %v817 = vunpack.c.l.b16 %v493
    %v818 = vunpack.c.l.b16 %v494
    %v819 = vunpack.c.l.b16 %v495
    %v820 = vunpack.c.l.b16 %v496
    %v821 = vunpack.c.l.b16 %v497
    %v822 = vunpack.c.l.b16 %v498
    %v823 = vunpack.c.l.b16 %v499
    %v824 = vunpack.c.l.b16 %v500
    %v825 = vunpack.c.l.b16 %v501
    %v826 = vunpack.c.l.b16 %v502
    %v827 = vunpack.c.l.b16 %v503
    %v828 = vunpack.c.l.b16 %v504
    %v829 = vunpack.c.l.b16 %v505
    %v830 = vunpack.c.l.b16 %v506
    %v831 = vunpack.c.l.b16 %v507
    %v832 = vunpack.c.l.b16 %v508
    %v833 = vunpack.c.l.b16 %v509
    %v834 = vunpack.c.l.b16 %v510
    %v835 = vunpack.c.l.b16 %v511
    %v836 = vunpack.c.l.b16 %v512
    %v837 = vunpack.c.l.b16 %v513
    %v838 = vunpack.c.l.b16 %v514
    %v839 = vunpack.c.l.b16 %v515
    %v840 = vunpack.c.l.b16 %v516
    %v841 = vunpack.c.l.b16 %v517
    %v842 = vunpack.c.l.b16 %v518
    %v843 = vunpack.c.l.b16 %v519
    %v844 = vunpack.c.l.b16 %v520
    %v845 = vunpack.c.l.b16 %v521
    %v846 = vunpack.c.l.b16 %v522
    %v847 = vunpack.c.l.b16 %v523
    %v848 = vunpack.c.l.b16 %v524
    %v849 = vunpack.c.l.b16 %v525
    %v850 = vunpack.c.l.b16 %v526
    %v851 = vunpack.c.l.b16 %v527
    %v852 = vunpack.c.l.b16 %v528
    %v853 = vunpack.c.l.b16 %v529
    %v854 = vunpack.c.l.b16 %v530
    %v855 = vunpack.c.l.b16 %v531
    %v856 = vunpack.c.l.b16 %v532
    %v857 = vunpack.c.l.b16 %v533
    %v858 = vunpack.c.l.b16 %v534
    %v859 = vunpack.c.l.b16 %v535
    %v860 = vunpack.c.l.b16 %v536
    %v861 = vunpack.c.l.b16 %v537
    %v862 = vunpack.c.l.b16 %v538
    %v863 = vunpack.c.l.b16 %v539
    %v864 = vunpack.c.l.b16 %v540
    %v865 = vunpack.c.l.b16 %v541
    %v866 = vunpack.c.l.b16 %v542
    %v867 = vunpack.c.l.b16 %v543
    %v868 = vunpack.c.l.b16 %v544
    %v869 = vunpack.c.l.b16 %v545
    %v870 = vunpack.c.l.b16 %v546
    %v871 = vunpack.c.l.b16 %v547
    %v872 = vunpack.c.l.b16 %v548
    %v873 = vunpack.c.l.b16 %v549
    %v874 = vunpack.c.l.b16 %v550
    %v875 = vunpack.c.l.b16 %v551
    %v876 = vunpack.c.l.b16 %v552
    %v877 = vunpack.c.l.b16 %v553
    %v878 = vunpack.c.l.b16 %v554
    %v879 = vunpack.c.l.b16 %v555
    %v880 = vunpack.c.l.b16 %v556
    %v881 = vunpack.c.l.b16 %v557
    %v882 = vunpack.c.l.b16 %v558
    %v883 = vunpack.c.l.b16 %v559
    %v884 = vunpack.c.l.b16 %v560
    %v885 = vunpack.c.l.b16 %v561
    %v886 = vunpack.c.l.b16 %v562
    %v887 = vunpack.c.l.b16 %v563
    %v888 = vunpack.c.l.b16 %v564
    %v889 = vunpack.c.l.b16 %v565
    %v890 = vunpack.c.l.b16 %v566
    %v891 = vunpack.c.l.b16 %v567
    %v892 = vunpack.c.l.b16 %v568
    %v893 = vunpack.c.l.b16 %v569
    %v894 = vunpack.c.l.b16 %v570
    %v895 = vunpack.c.l.b16 %v571
    %v896 = vunpack.c.l.b16 %v572
    %v897 = vunpack.c.l.b16 %v573
    %v898 = vunpack.c.l.b16 %v574
    %v899 = vunpack.c.l.b16 %v575
    %v900 = vunpack.c.l.b16 %v576
    %v901 = vunpack.c.l.b16 %v577
    %v902 = vunpack.c.l.b16 %v578
    %v903 = vunpack.c.l.b16 %v579
    %v904 = vunpack.c.l.b16 %v580
    %v905 = vunpack.c.l.b16 %v581
    %v906 = vunpack.c.l.b16 %v582
    %v907 = vunpack.c.l.b16 %v583
    %v908 = vunpack.c.l.b16 %v584
    %v909 = vunpack.c.l.b16 %v585
    %v910 = vunpack.c.l.b16 %v586
    %v911 = vunpack.c.l.b16 %v587
    %v912 = vunpack.c.l.b16 %v588
    %v913 = vunpack.c.l.b16 %v589
    %v914 = vunpack.c.l.b16 %v590
    %v915 = vunpack.c.l.b16 %v591
    %v916 = vunpack.c.l.b16 %v592
    %v917 = vunpack.c.l.b16 %v593
    %v918 = vunpack.c.l.b16 %v594
    %v919 = vunpack.c.l.b16 %v595
    %v920 = vunpack.c.l.b16 %v596
    %v921 = vunpack.c.l.b16 %v597
    %v922 = vunpack.c.l.b16 %v598
    %v923 = vunpack.c.l.b16 %v599
    %v924 = vunpack.c.l.b16 %v600
    %v925 = vunpack.c.l.b16 %v601
    %v926 = vunpack.c.l.b16 %v602
    %v927 = vunpack.c.l.b16 %v603
    %v928 = vunpack.c.l.b16 %v604
    %v929 = vunpack.c.l.b16 %v605
    %v930 = vunpack.c.l.b16 %v606
    %v931 = vunpack.c.l.b16 %v607
    %v932 = vunpack.c.l.b16 %v608
    %v933 = vpack.c.b16 %v774, %v773
    %v934 = vpack.c.b16 %v776, %v775
    %v935 = vpack.c.b16 %v778, %v777
    %v936 = vpack.c.b16 %v780, %v779
    %v937 = vpack.c.b16 %v782, %v781
    %v938 = vpack.c.b16 %v784, %v783
    %v939 = vpack.c.b16 %v786, %v785
    %v940 = vpack.c.b16 %v788, %v787
    %v941 = vpack.c.b16 %v790, %v789
    %v942 = vpack.c.b16 %v792, %v791
    %v943 = vpack.c.b16 %v794, %v793
    %v944 = vpack.c.b16 %v796, %v795
    %v945 = vpack.c.b16 %v798, %v797
    %v946 = vpack.c.b16 %v800, %v799
    %v947 = vpack.c.b16 %v802, %v801
    %v948 = vpack.c.b16 %v804, %v803
    %v949 = vpack.c.b16 %v806, %v805
    %v950 = vpack.c.b16 %v808, %v807
    %v951 = vpack.c.b16 %v810, %v809
    %v952 = vpack.c.b16 %v812, %v811
    %v953 = vpack.c.b16 %v814, %v813
    %v954 = vpack.c.b16 %v816, %v815
    %v955 = vpack.c.b16 %v818, %v817
    %v956 = vpack.c.b16 %v820, %v819
    %v957 = vpack.c.b16 %v822, %v821
    %v958 = vpack.c.b16 %v824, %v823
    %v959 = vpack.c.b16 %v826, %v825
    %v960 = vpack.c.b16 %v828, %v827
    %v961 = vpack.c.b16 %v830, %v829
    %v962 = vpack.c.b16 %v832, %v831
    %v963 = vpack.c.b16 %v834, %v833
    %v964 = vpack.c.b16 %v836, %v835
    %v965 = vpack.c.b16 %v838, %v837
    %v966 = vpack.c.b16 %v840, %v839
    %v967 = vpack.c.b16 %v842, %v841
    %v968 = vpack.c.b16 %v844, %v843
    %v969 = vpack.c.b16 %v846, %v845
    %v970 = vpack.c.b16 %v848, %v847
    %v971 = vpack.c.b16 %v850, %v849
    %v972 = vpack.c.b16 %v852, %v851
    %v973 = vpack.c.b16 %v854, %v853
    %v974 = vpack.c.b16 %v856, %v855
    %v975 = vpack.c.b16 %v858, %v857
    %v976 = vpack.c.b16 %v860, %v859
    %v977 = vpack.c.b16 %v862, %v861
    %v978 = vpack.c.b16 %v864, %v863
    %v979 = vpack.c.b16 %v866, %v865
    %v980 = vpack.c.b16 %v868, %v867
    %v981 = vpack.c.b16 %v870, %v869
    %v982 = vpack.c.b16 %v872, %v871
    %v983 = vpack.c.b16 %v874, %v873
    %v984 = vpack.c.b16 %v876, %v875
    %v985 = vpack.c.b16 %v878, %v877
    %v986 = vpack.c.b16 %v880, %v879
    %v987 = vpack.c.b16 %v882, %v881
    %v988 = vpack.c.b16 %v884, %v883
    %v989 = vpack.c.b16 %v886, %v885
    %v990 = vpack.c.b16 %v888, %v887
    %v991 = vpack.c.b16 %v890, %v889
    %v992 = vpack.c.b16 %v892, %v891
    %v993 = vpack.c.b16 %v894, %v893
    %v994 = vpack.c.b16 %v896, %v895
    %v995 = vpack.c.b16 %v898, %v897
    %v996 = vpack.c.b16 %v900, %v899
    %v997 = vpack.c.b16 %v902, %v901
    %v998 = vpack.c.b16 %v904, %v903
    %v999 = vpack.c.b16 %v906, %v905
    %v1000 = vpack.c.b16 %v908, %v907
    %v1001 = vpack.c.b16 %v910, %v909
    %v1002 = vpack.c.b16 %v912, %v911
    %v1003 = vpack.c.b16 %v914, %v913
    %v1004 = vpack.c.b16 %v916, %v915
    %v1005 = vpack.c.b16 %v918, %v917
    %v1006 = vpack.c.b16 %v920, %v919
    %v1007 = vpack.c.b16 %v922, %v921
    %v1008 = vpack.c.b16 %v924, %v923
    %v1009 = vpack.c.b16 %v926, %v925
    %v1010 = vpack.c.b16 %v928, %v927
    %v1011 = vpack.c.b16 %v930, %v929
    %v1012 = vpack.c.b16 %v932, %v931
    %1093 = vmatpush.bf16.msra.mxu0 %v940
    %1094 = vmatpush.bf16.msra.mxu0 %v939
    %1095 = vmatpush.bf16.msra.mxu0 %v938
    %1096 = vmatpush.bf16.msra.mxu0 %v937
    %1097 = vmatpush.bf16.msra.mxu0 %v936
    %1098 = vmatpush.bf16.msra.mxu0 %v935
    %1099 = vmatpush.bf16.msra.mxu0 %v934
    %1100 = vmatpush.bf16.msra.mxu0 %v933
    %1101 = vmatmul.bf16.gmra.mxu0 %v439
    %v1102 = vpop.f32.mrf.mxu0
    %v1103 = vadd.f32 %v611, %v1102
    %v1104 = vpop.f32.mrf.mxu0
    %v1105 = vadd.f32 %v611, %v1104
    %1106 = vdwg.mxu0
    %1107 = vmatpush.bf16.msra.mxu0 %v948
    %1108 = vmatpush.bf16.msra.mxu0 %v947
    %1109 = vmatpush.bf16.msra.mxu0 %v946
    %1110 = vmatpush.bf16.msra.mxu0 %v945
    %1111 = vmatpush.bf16.msra.mxu0 %v944
    %1112 = vmatpush.bf16.msra.mxu0 %v943
    %1113 = vmatpush.bf16.msra.mxu0 %v942
    %1114 = vmatpush.bf16.msra.mxu0 %v941
    %1115 = vmatmul.bf16.gmra.mxu0 %v440
    %v1116 = vpop.f32.mrf.mxu0
    %v1117 = vadd.f32 %v1103, %v1116
    %v1118 = vpop.f32.mrf.mxu0
    %v1119 = vadd.f32 %v1105, %v1118
    %1120 = vdwg.mxu0
    %1121 = vmatpush.bf16.msra.mxu0 %v956
    %1122 = vmatpush.bf16.msra.mxu0 %v955
    %1123 = vmatpush.bf16.msra.mxu0 %v954
    %1124 = vmatpush.bf16.msra.mxu0 %v953
    %1125 = vmatpush.bf16.msra.mxu0 %v952
    %1126 = vmatpush.bf16.msra.mxu0 %v951
    %1127 = vmatpush.bf16.msra.mxu0 %v950
    %1128 = vmatpush.bf16.msra.mxu0 %v949
    %1129 = vmatmul.bf16.gmra.mxu0 %v441
    %v1130 = vpop.f32.mrf.mxu0
    %v1131 = vadd.f32 %v1117, %v1130
    %v1132 = vpop.f32.mrf.mxu0
    %v1133 = vadd.f32 %v1119, %v1132
    %1134 = vdwg.mxu0
    %1135 = vmatpush.bf16.msra.mxu0 %v964
    %1136 = vmatpush.bf16.msra.mxu0 %v963
    %1137 = vmatpush.bf16.msra.mxu0 %v962
    %1138 = vmatpush.bf16.msra.mxu0 %v961
    %1139 = vmatpush.bf16.msra.mxu0 %v960
    %1140 = vmatpush.bf16.msra.mxu0 %v959
    %1141 = vmatpush.bf16.msra.mxu0 %v958
    %1142 = vmatpush.bf16.msra.mxu0 %v957
    %1143 = vmatmul.bf16.gmra.mxu0 %v442
    %v1144 = vpop.f32.mrf.mxu0
    %v1145 = vadd.f32 %v1131, %v1144
    %v1146 = vpop.f32.mrf.mxu0
    %v1147 = vadd.f32 %v1133, %v1146
    %1148 = vdwg.mxu0
    %1149 = vmatpush.bf16.msra.mxu0 %v972
    %1150 = vmatpush.bf16.msra.mxu0 %v971
    %1151 = vmatpush.bf16.msra.mxu0 %v970
    %1152 = vmatpush.bf16.msra.mxu0 %v969
    %1153 = vmatpush.bf16.msra.mxu0 %v968
    %1154 = vmatpush.bf16.msra.mxu0 %v967
    %1155 = vmatpush.bf16.msra.mxu0 %v966
    %1156 = vmatpush.bf16.msra.mxu0 %v965
    %1157 = vmatmul.bf16.gmra.mxu0 %v443
    %v1158 = vpop.f32.mrf.mxu0
    %v1159 = vadd.f32 %v1145, %v1158
    %v1160 = vpop.f32.mrf.mxu0
    %v1161 = vadd.f32 %v1147, %v1160
    %1162 = vdwg.mxu0
    %1163 = vmatpush.bf16.msra.mxu0 %v980
    %1164 = vmatpush.bf16.msra.mxu0 %v979
    %1165 = vmatpush.bf16.msra.mxu0 %v978
    %1166 = vmatpush.bf16.msra.mxu0 %v977
    %1167 = vmatpush.bf16.msra.mxu0 %v976
    %1168 = vmatpush.bf16.msra.mxu0 %v975
    %1169 = vmatpush.bf16.msra.mxu0 %v974
    %1170 = vmatpush.bf16.msra.mxu0 %v973
    %1171 = vmatmul.bf16.gmra.mxu0 %v444
    %v1172 = vpop.f32.mrf.mxu0
    %v1173 = vadd.f32 %v1159, %v1172
    %v1174 = vpop.f32.mrf.mxu0
    %v1175 = vadd.f32 %v1161, %v1174
    %1176 = vdwg.mxu0
    %1177 = vmatpush.bf16.msra.mxu0 %v988
    %1178 = vmatpush.bf16.msra.mxu0 %v987
    %1179 = vmatpush.bf16.msra.mxu0 %v986
    %1180 = vmatpush.bf16.msra.mxu0 %v985
    %1181 = vmatpush.bf16.msra.mxu0 %v984
    %1182 = vmatpush.bf16.msra.mxu0 %v983
    %1183 = vmatpush.bf16.msra.mxu0 %v982
    %1184 = vmatpush.bf16.msra.mxu0 %v981
    %1185 = vmatmul.bf16.gmra.mxu0 %v445
    %v1186 = vpop.f32.mrf.mxu0
    %v1187 = vadd.f32 %v1173, %v1186
    %v1188 = vpop.f32.mrf.mxu0
    %v1189 = vadd.f32 %v1175, %v1188
    %1190 = vdwg.mxu0
    %1191 = vmatpush.bf16.msra.mxu0 %v996
    %1192 = vmatpush.bf16.msra.mxu0 %v995
    %1193 = vmatpush.bf16.msra.mxu0 %v994
    %1194 = vmatpush.bf16.msra.mxu0 %v993
    %1195 = vmatpush.bf16.msra.mxu0 %v992
    %1196 = vmatpush.bf16.msra.mxu0 %v991
    %1197 = vmatpush.bf16.msra.mxu0 %v990
    %1198 = vmatpush.bf16.msra.mxu0 %v989
    %1199 = vmatmul.bf16.gmra.mxu0 %v446
    %v1200 = vpop.f32.mrf.mxu0
    %v1201 = vadd.f32 %v1187, %v1200
    %v1202 = vpop.f32.mrf.mxu0
    %v1203 = vadd.f32 %v1189, %v1202
    %1204 = vdwg.mxu0
    %1205 = vmatpush.bf16.msra.mxu0 %v1004
    %1206 = vmatpush.bf16.msra.mxu0 %v1003
    %1207 = vmatpush.bf16.msra.mxu0 %v1002
    %1208 = vmatpush.bf16.msra.mxu0 %v1001
    %1209 = vmatpush.bf16.msra.mxu0 %v1000
    %1210 = vmatpush.bf16.msra.mxu0 %v999
    %1211 = vmatpush.bf16.msra.mxu0 %v998
    %1212 = vmatpush.bf16.msra.mxu0 %v997
    %1213 = vmatmul.bf16.gmra.mxu0 %v447
    %v1214 = vpop.f32.mrf.mxu0
    %v1215 = vadd.f32 %v1201, %v1214
    %v1216 = vpop.f32.mrf.mxu0
    %v1217 = vadd.f32 %v1203, %v1216
    %1218 = vdwg.mxu0
    %1219 = vmatpush.bf16.msra.mxu0 %v1012
    %1220 = vmatpush.bf16.msra.mxu0 %v1011
    %1221 = vmatpush.bf16.msra.mxu0 %v1010
    %1222 = vmatpush.bf16.msra.mxu0 %v1009
    %1223 = vmatpush.bf16.msra.mxu0 %v1008
    %1224 = vmatpush.bf16.msra.mxu0 %v1007
    %1225 = vmatpush.bf16.msra.mxu0 %v1006
    %1226 = vmatpush.bf16.msra.mxu0 %v1005
    %1227 = vmatmul.bf16.gmra.mxu0 %v448
    %v1228 = vpop.f32.mrf.mxu0
    %v1229 = vadd.f32 %v1215, %v1228
    %v1230 = vpop.f32.mrf.mxu0
    %v1231 = vadd.f32 %v1217, %v1230
    %1232 = vdwg.mxu0
    %v1233 = vxor.u32 %v1229, 2147483648
    %v1234 = vxor.u32 %v1231, 2147483648
    %v1235 = vmul.f32 %v1233, 1.442695
    %v1236 = vpow.pop %v1235
    %v1237 = vmul.f32 %v1234, 1.442695
    %v1238 = vpow.pop %v1237
    %v1239 = vadd.f32 %v1236, 1.0
    %v1240 = vadd.f32 %v1238, 1.0
    %v1241 = vrcp.pop %v1239
    %v1242 = vmul.f32 %v1239, %v1241
    %v1243 = vsub.f32 1.0, %v1242
    %v1244 = vmul.f32 %v1241, %v1243
    %v1245 = vadd.f32 %v1241, %v1244
    %vm1246 = vweird.f32 %v1239
    %vm1247 = vweird.f32 %v1241
    %vm1248 = vmor %vm1246, %vm1247
    %v1249 = vsel %vm1248, %v1241, %v1245
    %v1250 = vand.u32 2147483647, %v1239
    %vm1251 = vcmp.eq.f32.partialorder %v1250, 8.507059e+37
    %v1252 = vand.u32 %v1239, 2147483648
    %v1253 = vor.u32 1.1754944e-38, %v1252
    %v1254 = vsel %vm1251, %v1253, %v1249
    %v1255 = vmul.f32 1.0, %v1254
    %v1256 = vrcp.pop %v1240
    %v1257 = vmul.f32 %v1240, %v1256
    %v1258 = vsub.f32 1.0, %v1257
    %v1259 = vmul.f32 %v1256, %v1258
    %v1260 = vadd.f32 %v1256, %v1259
    %vm1261 = vweird.f32 %v1240
    %vm1262 = vweird.f32 %v1256
    %vm1263 = vmor %vm1261, %vm1262
    %v1264 = vsel %vm1263, %v1256, %v1260
    %v1265 = vand.u32 2147483647, %v1240
    %vm1266 = vcmp.eq.f32.partialorder %v1265, 8.507059e+37
    %v1267 = vand.u32 %v1240, 2147483648
    %v1268 = vor.u32 1.1754944e-38, %v1267
    %v1269 = vsel %vm1266, %v1268, %v1264
    %v1270 = vmul.f32 1.0, %v1269
    %v1271 = vmul.f32 %v1229, %v1255
    %v1272 = vmul.f32 %v1231, %v1270
    %v1273 = vld [vmem:[%s5] sm:$0x1]
    %v1275 = vperm.slane %v1273, 0
    %v1277 = vmul.f32 %v1271, %v1275
    %v1278 = vmul.f32 %v1272, %v1275
    %1279 = vadd.xlane.f32.xlu0 %v1277
    %v1280 = vpop.xlane.xlu0 %1279
    %1281 = vadd.xlane.f32.xlu0 %v1278
    %v1282 = vpop.xlane.xlu0 %1281
    %s1283 = sld [smem:[#allocation2]]
    %v1284 = vstv %s1283
    %v1285 = vadd.f32 %v1280, %v1284
    %v1286 = vadd.f32 %v1282, %v1284
    %1287 = vst [vmem:[#allocation11] sm:$0xff] %v1285
    %1288 = vst [vmem:[#allocation11 + $0x8] sm:$0xff] %v1286
    // Predicated region
    $region46: #{tpu_custom_call.1} parent=1 // pred_check
      _
    $region47: #{tpu_custom_call.1} parent=1 // pred_check_branch
      %1290 = sbr.rel (0) target = $region49
    $region48: #{tpu_custom_call.1} parent=1 // pred_region
      %1292 = vsyncadd [#allocation5], 0
      %s1293 = sshll.u32 [#allocation11], 4
      %s1294 = int_to_ptr.vmem [resolvable:$true] %s1293
      %s1295 = sshll.u32 %s7, 4
      %s1296 = int_to_ptr.hbm [resolvable:$true] %s1295
      %1301 = dma.vmem_to_hbm [thread:$0]  %s1294, 256, %s1296, [#allocation5], 128, 128, 8
    $region49: #{tpu_custom_call.1} parent=1 // pred_fallthru
      _
    // Predicated region
    $region50: #{tpu_custom_call.1} parent=1 // pred_check
      _
    $region51: #{tpu_custom_call.1} parent=1 // pred_check_branch
      %1303 = sbr.rel (0) target = $region53
    $region52: #{tpu_custom_call.1} parent=1 // pred_region
      %1305 = dma.done [#allocation5], 256
    $region53: #{tpu_custom_call.1} parent=1 // pred_fallthru
      _
    %1306 = vsyncpa [#allocation4], 1
    %1307 = vsyncpa [#allocation7], 1
    %1308 = vsyncpa [#allocation10], 1
    %1309 = vsyncpa [#allocation5], 1

</llo_original>
